<compile_context>
chip_gen: v6e
topology: v6e:2x2x1
jax: 0.10.0
libtpu: 0.0.40
codegen_flags: <defaults>
</compile_context>

<pallas_src>
import jax
import jax.numpy as jnp
from jax.experimental import pallas as pl
from jax.experimental.pallas import tpu as pltpu

UPPER = 0.9
LOWER = 0.1
LMDA = 0.5
RECON_SCALE = 0.0005


def capsule_loss_kernel(labels_ref, logits_ref, img_ref, rec_ref, out_ref, acc_ref):
    i = pl.program_id(0)

    # Margin loss: computed exactly once (resident [B, NC] blocks).
    @pl.when(i == 0)
    def _init():
        logits = logits_ref[...].astype(jnp.float32)
        labels = labels_ref[...].astype(jnp.float32)
        left = jnp.maximum(UPPER - logits, 0.0)
        right = jnp.maximum(logits - LOWER, 0.0)
        margin = (jnp.sum(labels * left * left)
                  + LMDA * jnp.sum((1.0 - labels) * right * right))
        acc_ref[0, 0] = margin

    # Streaming reconstruction MSE (reduction='sum') over this tile.
    diff = rec_ref[...].astype(jnp.float32) - img_ref[...].astype(jnp.float32)
    acc_ref[0, 0] += RECON_SCALE * jnp.sum(diff * diff)

    @pl.when(i == pl.num_programs(0) - 1)
    def _fin():
        out_ref[0, 0] = acc_ref[0, 0]


def capsule_loss(images, labels, logits, reconstructions, *,
                 tile_d=1024, max_tile_rows=256):
    """images: [B,C,H,W]; labels/logits: [B,NC]; reconstructions: [B, C*H*W]."""
    B, NC = labels.shape
    total = images.size

    # Row-major flatten matches torch `.contiguous().view(images.shape)`.
    flat_img = images.reshape(-1)
    flat_rec = reconstructions.reshape(-1)

    # Lane-dense [rows, tile_d] layout (tile_d multiple of 128), rows padded to
    # a multiple of the row-tile (multiple of 8). Padding is zero -> adds 0.
    n_rows = -(-total // tile_d)
    rows_8 = ((n_rows + 7) // 8) * 8
    tile_rows = min(max_tile_rows, rows_8)
    n_rows_padded = ((n_rows + tile_rows - 1) // tile_rows) * tile_rows
    pad = n_rows_padded * tile_d - total
    img2 = jnp.pad(flat_img, (0, pad)).reshape(n_rows_padded, tile_d)
    rec2 = jnp.pad(flat_rec, (0, pad)).reshape(n_rows_padded, tile_d)

    grid = (n_rows_padded // tile_rows,)

    item = jnp.dtype(images.dtype).itemsize
    cost = pl.CostEstimate(
        flops=3 * total + 8 * B * NC,
        transcendentals=0,
        bytes_accessed=int(2 * total * item + 2 * B * NC * 4 + 4),
    )

    out = pl.pallas_call(
        capsule_loss_kernel,
        out_shape=jax.ShapeDtypeStruct((1, 1), jnp.float32),
        grid=grid,
        in_specs=[
            # Tiny margin operands: full-array blocks, resident across the grid.
            pl.BlockSpec((B, NC), lambda i: (0, 0)),               # labels
            pl.BlockSpec((B, NC), lambda i: (0, 0)),               # logits
            # Streamed MSE operands: pipelined row-tiles.
            pl.BlockSpec((tile_rows, tile_d), lambda i: (i, 0)),   # images (flat)
            pl.BlockSpec((tile_rows, tile_d), lambda i: (i, 0)),   # recon  (flat)
        ],
        out_specs=pl.BlockSpec(memory_space=pltpu.SMEM),
        scratch_shapes=[pltpu.SMEM((1, 1), jnp.float32)],
        compiler_params=pltpu.CompilerParams(
            dimension_semantics=("arbitrary",),
        ),
        cost_estimate=cost,
    )(labels, logits, img2, rec2)
    return out[0, 0]


def capsule_loss_ref(images, labels, logits, reconstructions):
    left = jnp.maximum(UPPER - logits, 0.0) ** 2
    right = jnp.maximum(logits - LOWER, 0.0) ** 2
    margin = jnp.sum(labels * left) + LMDA * jnp.sum((1.0 - labels) * right)
    rec = reconstructions.reshape(images.shape)
    recon = jnp.sum((rec - images) ** 2)
    return margin + RECON_SCALE * recon


if __name__ == "__main__":
    key = jax.random.PRNGKey(0)
    k1, k2, k3, k4 = jax.random.split(key, 4)

    B, C, H, W = 2, 4, 16, 16
    NUM_CLASSES = 10

    images = jax.random.uniform(k1, (B, C, H, W), dtype=jnp.float32)
    label_idx = jax.random.randint(k2, (B,), 0, NUM_CLASSES)
    labels = jax.nn.one_hot(label_idx, NUM_CLASSES, dtype=jnp.float32)
    logits = jax.random.uniform(k3, (B, NUM_CLASSES), dtype=jnp.float32)  # capsule lengths in [0,1)
    reconstructions = jax.random.uniform(k4, (B, C * H * W), dtype=jnp.float32)

    loss = jax.block_until_ready(capsule_loss(images, labels, logits, reconstructions))
    ref = jax.block_until_ready(capsule_loss_ref(images, labels, logits, reconstructions))

    assert jnp.allclose(loss, ref, rtol=1e-5, atol=1e-5), (loss, ref)
    print("KERNEL_OK")
</pallas_src>

<mosaic_0001>
module attributes {stable_mosaic.version = 11 : i64} {
  func.func @capsule_loss_kernel(%arg0: i32, %arg1: memref<2x10xf32, #tpu.memory_space<vmem>>, %arg2: memref<2x10xf32, #tpu.memory_space<vmem>>, %arg3: memref<8x1024xf32, #tpu.memory_space<vmem>>, %arg4: memref<8x1024xf32, #tpu.memory_space<vmem>>, %arg5: memref<1x1xf32, #tpu.memory_space<smem>>, %arg6: memref<1x1xf32, #tpu.memory_space<smem>>) attributes {dimension_semantics = [#tpu.dimension_semantics<arbitrary>], iteration_bounds = array<i64: 1>, scalar_prefetch = 0 : i64, scratch_operands = 1 : i64, tpu.core_type = #tpu.core_type<tc>, window_params = [{pipeline_mode = #tpu.pipeline_mode<synchronous>, transform_indices = @transform_0, window_bounds = array<i64: 2, 10>}, {pipeline_mode = #tpu.pipeline_mode<synchronous>, transform_indices = @transform_1, window_bounds = array<i64: 2, 10>}, {transform_indices = @transform_2, window_bounds = array<i64: 8, 1024>}, {transform_indices = @transform_3, window_bounds = array<i64: 8, 1024>}, {transform_indices = @transform_4, window_bounds = array<i64: 1, 1>}]} {
    %c0_i32 = arith.constant 0 : i32
    %0 = arith.cmpi eq, %arg0, %c0_i32 : i32
    %1 = arith.extui %0 : i1 to i32
    %c0_i32_0 = arith.constant 0 : i32
    %2 = arith.cmpi ne, %1, %c0_i32_0 : i32
    scf.if %2 {
      %c0_11 = arith.constant 0 : index
      %c0_12 = arith.constant 0 : index
      %18 = vector.load %arg2[%c0_11, %c0_12] : memref<2x10xf32, #tpu.memory_space<vmem>>, vector<2x10xf32>
      %c0_13 = arith.constant 0 : index
      %c0_14 = arith.constant 0 : index
      %19 = vector.load %arg1[%c0_13, %c0_14] : memref<2x10xf32, #tpu.memory_space<vmem>>, vector<2x10xf32>
      %cst_15 = arith.constant 0.899999976 : f32
      %20 = vector.broadcast %cst_15 : f32 to vector<2x10xf32>
      %21 = arith.subf %20, %18 : vector<2x10xf32>
      %cst_16 = arith.constant 0.000000e+00 : f32
      %22 = vector.broadcast %cst_16 : f32 to vector<2x10xf32>
      %23 = arith.maximumf %21, %22 : vector<2x10xf32>
      %cst_17 = arith.constant 1.000000e-01 : f32
      %24 = vector.broadcast %cst_17 : f32 to vector<2x10xf32>
      %25 = arith.subf %18, %24 : vector<2x10xf32>
      %cst_18 = arith.constant 0.000000e+00 : f32
      %26 = vector.broadcast %cst_18 : f32 to vector<2x10xf32>
      %27 = arith.maximumf %25, %26 : vector<2x10xf32>
      %28 = arith.mulf %19, %23 : vector<2x10xf32>
      %29 = arith.mulf %28, %23 : vector<2x10xf32>
      %30 = vector.shape_cast %29 : vector<2x10xf32> to vector<1x2x10xf32>
      %cst_19 = arith.constant dense<0.000000e+00> : vector<1xf32>
      %31 = vector.multi_reduction <add>, %30, %cst_19 [1, 2] : vector<1x2x10xf32> to vector<1xf32>
      %32 = vector.shape_cast %31 : vector<1xf32> to vector<1x1x1xf32>
      %33 = vector.extract %32[0, 0, 0] : f32 from vector<1x1x1xf32>
      %cst_20 = arith.constant 1.000000e+00 : f32
      %34 = vector.broadcast %cst_20 : f32 to vector<2x10xf32>
      %35 = arith.subf %34, %19 : vector<2x10xf32>
      %36 = arith.mulf %35, %27 : vector<2x10xf32>
      %37 = arith.mulf %36, %27 : vector<2x10xf32>
      %38 = vector.shape_cast %37 : vector<2x10xf32> to vector<1x2x10xf32>
      %cst_21 = arith.constant dense<0.000000e+00> : vector<1xf32>
      %39 = vector.multi_reduction <add>, %38, %cst_21 [1, 2] : vector<1x2x10xf32> to vector<1xf32>
      %40 = vector.shape_cast %39 : vector<1xf32> to vector<1x1x1xf32>
      %41 = vector.extract %40[0, 0, 0] : f32 from vector<1x1x1xf32>
      %cst_22 = arith.constant 5.000000e-01 : f32
      %42 = arith.mulf %cst_22, %41 : f32
      %43 = arith.addf %33, %42 : f32
      %c0_23 = arith.constant 0 : index
      %c0_24 = arith.constant 0 : index
      %44 = memref.load %arg6[%c0_23, %c0_24] : memref<1x1xf32, #tpu.memory_space<smem>>
      memref.store %43, %arg6[%c0_23, %c0_24] : memref<1x1xf32, #tpu.memory_space<smem>>
    } else {
    }
    %c0 = arith.constant 0 : index
    %c0_1 = arith.constant 0 : index
    %3 = vector.load %arg4[%c0, %c0_1] : memref<8x1024xf32, #tpu.memory_space<vmem>>, vector<8x1024xf32>
    %c0_2 = arith.constant 0 : index
    %c0_3 = arith.constant 0 : index
    %4 = vector.load %arg3[%c0_2, %c0_3] : memref<8x1024xf32, #tpu.memory_space<vmem>>, vector<8x1024xf32>
    %5 = arith.subf %3, %4 : vector<8x1024xf32>
    %c0_4 = arith.constant 0 : index
    %c0_5 = arith.constant 0 : index
    %6 = memref.load %arg6[%c0_4, %c0_5] : memref<1x1xf32, #tpu.memory_space<smem>>
    %7 = arith.mulf %5, %5 : vector<8x1024xf32>
    %8 = vector.shape_cast %7 : vector<8x1024xf32> to vector<1x8x1024xf32>
    %cst = arith.constant dense<0.000000e+00> : vector<1xf32>
    %9 = vector.multi_reduction <add>, %8, %cst [1, 2] : vector<1x8x1024xf32> to vector<1xf32>
    %10 = vector.shape_cast %9 : vector<1xf32> to vector<1x1x1xf32>
    %11 = vector.extract %10[0, 0, 0] : f32 from vector<1x1x1xf32>
    %cst_6 = arith.constant 5.000000e-04 : f32
    %12 = arith.mulf %cst_6, %11 : f32
    %13 = arith.addf %6, %12 : f32
    %c0_7 = arith.constant 0 : index
    %c0_8 = arith.constant 0 : index
    %14 = memref.load %arg6[%c0_7, %c0_8] : memref<1x1xf32, #tpu.memory_space<smem>>
    memref.store %13, %arg6[%c0_7, %c0_8] : memref<1x1xf32, #tpu.memory_space<smem>>
    %c0_i32_9 = arith.constant 0 : i32
    %15 = arith.cmpi eq, %arg0, %c0_i32_9 : i32
    %16 = arith.extui %15 : i1 to i32
    %c0_i32_10 = arith.constant 0 : i32
    %17 = arith.cmpi ne, %16, %c0_i32_10 : i32
    scf.if %17 {
      %c0_11 = arith.constant 0 : index
      %c0_12 = arith.constant 0 : index
      %18 = memref.load %arg6[%c0_11, %c0_12] : memref<1x1xf32, #tpu.memory_space<smem>>
      %c0_13 = arith.constant 0 : index
      %c0_14 = arith.constant 0 : index
      %19 = memref.load %arg5[%c0_13, %c0_14] : memref<1x1xf32, #tpu.memory_space<smem>>
      memref.store %18, %arg5[%c0_13, %c0_14] : memref<1x1xf32, #tpu.memory_space<smem>>
    } else {
    }
    return
  }
  func.func @transform_0(%arg0: i32) -> (i32, i32) {
    %c0_i32 = arith.constant 0 : i32
    %c0_i32_0 = arith.constant 0 : i32
    %c0_i32_1 = arith.constant 0 : i32
    return %c0_i32, %c0_i32_0 : i32, i32
  }
  func.func @transform_1(%arg0: i32) -> (i32, i32) {
    %c0_i32 = arith.constant 0 : i32
    %c0_i32_0 = arith.constant 0 : i32
    %c0_i32_1 = arith.constant 0 : i32
    return %c0_i32, %c0_i32_0 : i32, i32
  }
  func.func @transform_2(%arg0: i32) -> (i32, i32) {
    %c0_i32 = arith.constant 0 : i32
    %c0_i32_0 = arith.constant 0 : i32
    return %arg0, %c0_i32 : i32, i32
  }
  func.func @transform_3(%arg0: i32) -> (i32, i32) {
    %c0_i32 = arith.constant 0 : i32
    %c0_i32_0 = arith.constant 0 : i32
    return %arg0, %c0_i32 : i32, i32
  }
  func.func @transform_4(%arg0: i32) -> (i32, i32) {
    %c0_i32 = arith.constant 0 : i32
    %c0_i32_0 = arith.constant 0 : i32
    %c0_i32_1 = arith.constant 0 : i32
    return %c0_i32, %c0_i32_0 : i32, i32
  }
}

</mosaic_0001>

<llo_original>
// kernel: tpu_custom_call.1
$region0: #{tpu_custom_call.1}
  #allocation0 [shape = 'u32[]', space=smem, size = 0x4, offset = 0x4, fixed_abs, tag = 'smem constant byte address 0x4 - core index']
  #allocation1 [shape = 'u32[144,128]{1,0:T(1,128)}', space=vmem, size = 0x12000, scoped, tag = 'internal scratch']
  #allocation2 [shape = 'f32[1,1]{1,0:T(1,128)}', space=smem, size = 0x200, scoped, tag = 'scratch operand']
  %s0 = inlined_call_operand.hbm [shape: f32[2,10], index: 0, kind: input, shape index: {}]
  %s1 = inlined_call_operand.hbm [shape: f32[2,10], index: 1, kind: input, shape index: {}]
  %s2 = inlined_call_operand.hbm [shape: f32[8,1024], index: 2, kind: input, shape index: {}]
  %s3 = inlined_call_operand.hbm [shape: f32[8,1024], index: 3, kind: input, shape index: {}]
  %s4 = inlined_call_operand.hbm [shape: f32[1,1], index: 4, kind: output, shape index: {}]
  %s5 = sld [smem:[#allocation0]]
  $region50: #{tpu_custom_call.1} parent=0
    _
  %s7 = ssub.s32 1, %s5
  %s8 = scalar_select 0, %s7, %s5
  $region1: #{tpu_custom_call.1} parent=0
    #allocation3 [shape = 'u8[1024]{0}', space=vmem, size = 0x400, scoped, tag = 'input window, operand 0, single buffered']
    #allocation4 [shape = 's32[1]{0}', space=sflag, size = 0x4, scoped, tag = 'scoped memory for tpu_custom_call.1']
    #allocation5 [shape = 's32[1]{0}', space=sflag, size = 0x4, scoped, tag = 'scoped memory for tpu_custom_call.1']
    #allocation6 [shape = 'u8[1024]{0}', space=vmem, size = 0x400, scoped, tag = 'input window, operand 1, single buffered']
    #allocation7 [shape = 's32[1]{0}', space=sflag, size = 0x4, scoped, tag = 'scoped memory for tpu_custom_call.1']
    #allocation8 [shape = 'u8[32768]{0}', space=vmem, size = 0x8000, scoped, tag = 'input window, operand 2, single buffered']
    #allocation9 [shape = 'u8[32768]{0}', space=vmem, size = 0x8000, scoped, tag = 'input window, operand 3, single buffered']
    #allocation10 [shape = 's32[1]{0}', space=sflag, size = 0x4, scoped, tag = 'scoped memory for tpu_custom_call.1']
    #allocation11 [shape = 'u8[512]{0}', space=smem, size = 0x200, scoped, tag = 'output window, operand 0, single buffered']
    %9 = vsyncpa [#allocation4], 0
    %10 = vsyncpa [#allocation7], 0
    %11 = vsyncpa [#allocation10], 0
    %12 = vsyncpa [#allocation5], 0
    // Predicated region
    $region2: #{tpu_custom_call.1} parent=1 // pred_check
      _
    $region3: #{tpu_custom_call.1} parent=1 // pred_check_branch
      %14 = sbr.rel (0) target = $region5
    $region4: #{tpu_custom_call.1} parent=1 // pred_region
      %s16 = ssub.s32 32, 32
      %17 = vsyncadd [#allocation4], %s16
      %s19 = sshll.u32 [#allocation3], 4
      %s20 = int_to_ptr.vmem [resolvable:$true] %s19
      %22 = dma.hbm_to_vmem [thread:$0]  %s0, 32, %s20, [#allocation4]
    $region5: #{tpu_custom_call.1} parent=1 // pred_fallthru
      _
    // Predicated region
    $region6: #{tpu_custom_call.1} parent=1 // pred_check
      _
    $region7: #{tpu_custom_call.1} parent=1 // pred_check_branch
      %24 = sbr.rel (0) target = $region9
    $region8: #{tpu_custom_call.1} parent=1 // pred_region
      %s26 = ssub.s32 32, 32
      %27 = vsyncadd [#allocation7], %s26
      %s29 = sshll.u32 [#allocation6], 4
      %s30 = int_to_ptr.vmem [resolvable:$true] %s29
      %32 = dma.hbm_to_vmem [thread:$0]  %s1, 32, %s30, [#allocation7]
    $region9: #{tpu_custom_call.1} parent=1 // pred_fallthru
      _
    // Predicated region
    $region10: #{tpu_custom_call.1} parent=1 // pred_check
      _
    $region11: #{tpu_custom_call.1} parent=1 // pred_check_branch
      %34 = sbr.rel (0) target = $region13
    $region12: #{tpu_custom_call.1} parent=1 // pred_region
      %s36 = ssub.s32 1024, 1024
      %37 = vsyncadd [#allocation7], %s36
      %s39 = sshll.u32 [#allocation8], 4
      %s40 = int_to_ptr.vmem [resolvable:$true] %s39
      %42 = dma.hbm_to_vmem [thread:$0]  %s2, 1024, %s40, [#allocation7]
    $region13: #{tpu_custom_call.1} parent=1 // pred_fallthru
      _
    // Predicated region
    $region14: #{tpu_custom_call.1} parent=1 // pred_check
      _
    $region15: #{tpu_custom_call.1} parent=1 // pred_check_branch
      %44 = sbr.rel (0) target = $region17
    $region16: #{tpu_custom_call.1} parent=1 // pred_region
      %s46 = ssub.s32 1024, 1024
      %47 = vsyncadd [#allocation10], %s46
      %s49 = sshll.u32 [#allocation9], 4
      %s50 = int_to_ptr.vmem [resolvable:$true] %s49
      %52 = dma.hbm_to_vmem [thread:$0]  %s3, 1024, %s50, [#allocation10]
    $region17: #{tpu_custom_call.1} parent=1 // pred_fallthru
      _
    // Predicated region
    $region18: #{tpu_custom_call.1} parent=1 // pred_check
      _
    $region19: #{tpu_custom_call.1} parent=1 // pred_check_branch
      %54 = sbr.rel (0) target = $region21
    $region20: #{tpu_custom_call.1} parent=1 // pred_region
      %55 = dma.done [#allocation4], 32
    $region21: #{tpu_custom_call.1} parent=1 // pred_fallthru
      _
    // Predicated region
    $region22: #{tpu_custom_call.1} parent=1 // pred_check
      _
    $region23: #{tpu_custom_call.1} parent=1 // pred_check_branch
      %57 = sbr.rel (0) target = $region25
    $region24: #{tpu_custom_call.1} parent=1 // pred_region
      %58 = dma.done [#allocation7], 32
    $region25: #{tpu_custom_call.1} parent=1 // pred_fallthru
      _
    // Predicated region
    $region26: #{tpu_custom_call.1} parent=1 // pred_check
      _
    $region27: #{tpu_custom_call.1} parent=1 // pred_check_branch
      %60 = sbr.rel (0) target = $region29
    $region28: #{tpu_custom_call.1} parent=1 // pred_region
      %61 = dma.done [#allocation7], 1024
    $region29: #{tpu_custom_call.1} parent=1 // pred_fallthru
      _
    // Predicated region
    $region30: #{tpu_custom_call.1} parent=1 // pred_check
      _
    $region31: #{tpu_custom_call.1} parent=1 // pred_check_branch
      %63 = sbr.rel (0) target = $region33
    $region32: #{tpu_custom_call.1} parent=1 // pred_region
      %64 = dma.done [#allocation10], 1024
    $region33: #{tpu_custom_call.1} parent=1 // pred_fallthru
      _
    %p65 = scmp.eq.s32.totalorder 0, 0
    // Predicated region
    $region34: #{tpu_custom_call.1} parent=1 // pred_check
      %p66 = pneg %p65
    $region35: #{tpu_custom_call.1} parent=1 // pred_check_branch
      %68 = sbr.rel (%p66) target = $region37
    $region36: #{tpu_custom_call.1} parent=1 // pred_region
      %v69 = vld [vmem:[#allocation6] sm:$0x3]
      %v70 = vld [vmem:[#allocation3] sm:$0x3]
      %v71 = vsub.f32 0.9, %v69
      %v72 = vmax.f32 %v71, 0.0
      %v73 = vsub.f32 %v69, 0.1
      %v74 = vmax.f32 %v73, 0.0
      %v75 = vmul.f32 %v70, %v72
      %v76 = vmul.f32 %v75, %v72
      %vm77 = vcmask 74752
      %v78 = vsel %vm77, %v76, 0.0
      %79 = vadd.xlane.f32.xlu0 %v78
      %v80 = vpop.xlane.xlu0 %79
      %v81 = vrot.slane %v80, 4
      %v82 = vadd.f32 %v80, %v81
      %v83 = vrot.slane %v82, 2
      %v84 = vadd.f32 %v82, %v83
      %v85 = vrot.slane %v84, 1
      %v86 = vadd.f32 %v84, %v85
      %s87 = vtos %v86
      %v88 = vsub.f32 1.0, %v70
      %v89 = vmul.f32 %v88, %v74
      %v90 = vmul.f32 %v89, %v74
      %v91 = vsel %vm77, %v90, 0.0
      %92 = vadd.xlane.f32.xlu0 %v91
      %v93 = vpop.xlane.xlu0 %92
      %v94 = vrot.slane %v93, 4
      %v95 = vadd.f32 %v93, %v94
      %v96 = vrot.slane %v95, 2
      %v97 = vadd.f32 %v95, %v96
      %v98 = vrot.slane %v97, 1
      %v99 = vadd.f32 %v97, %v98
      %s100 = vtos %v99
      %s101 = smul.f32 %s100, 0.5
      %s102 = sadd.f32 %s87, %s101
      %s103 = scalar_lea.smem [#allocation2], 0
      %104 = sst [smem:[%s103]] %s102
    $region37: #{tpu_custom_call.1} parent=1 // pred_fallthru
      _
    %v105 = vld [vmem:[#allocation9] sm:$0xff]
    %v106 = vld [vmem:[#allocation9 + $0x8] sm:$0xff]
    %v107 = vld [vmem:[#allocation9 + $0x10] sm:$0xff]
    %v108 = vld [vmem:[#allocation9 + $0x18] sm:$0xff]
    %v109 = vld [vmem:[#allocation9 + $0x20] sm:$0xff]
    %v110 = vld [vmem:[#allocation9 + $0x28] sm:$0xff]
    %v111 = vld [vmem:[#allocation9 + $0x30] sm:$0xff]
    %v112 = vld [vmem:[#allocation9 + $0x38] sm:$0xff]
    %v113 = vld [vmem:[#allocation8] sm:$0xff]
    %v114 = vld [vmem:[#allocation8 + $0x8] sm:$0xff]
    %v115 = vld [vmem:[#allocation8 + $0x10] sm:$0xff]
    %v116 = vld [vmem:[#allocation8 + $0x18] sm:$0xff]
    %v117 = vld [vmem:[#allocation8 + $0x20] sm:$0xff]
    %v118 = vld [vmem:[#allocation8 + $0x28] sm:$0xff]
    %v119 = vld [vmem:[#allocation8 + $0x30] sm:$0xff]
    %v120 = vld [vmem:[#allocation8 + $0x38] sm:$0xff]
    %v121 = vsub.f32 %v105, %v113
    %v122 = vsub.f32 %v106, %v114
    %v123 = vsub.f32 %v107, %v115
    %v124 = vsub.f32 %v108, %v116
    %v125 = vsub.f32 %v109, %v117
    %v126 = vsub.f32 %v110, %v118
    %v127 = vsub.f32 %v111, %v119
    %v128 = vsub.f32 %v112, %v120
    %s129 = sld [smem:[#allocation2]]
    %v130 = vmul.f32 %v121, %v121
    %v131 = vmul.f32 %v122, %v122
    %v132 = vmul.f32 %v123, %v123
    %v133 = vmul.f32 %v124, %v124
    %v134 = vmul.f32 %v125, %v125
    %v135 = vmul.f32 %v126, %v126
    %v136 = vmul.f32 %v127, %v127
    %v137 = vmul.f32 %v128, %v128
    %v138 = vadd.f32 %v130, %v131
    %v139 = vadd.f32 %v138, %v132
    %v140 = vadd.f32 %v139, %v133
    %v141 = vadd.f32 %v140, %v134
    %v142 = vadd.f32 %v141, %v135
    %v143 = vadd.f32 %v142, %v136
    %v144 = vadd.f32 %v143, %v137
    %145 = vadd.xlane.f32.xlu0 %v144
    %v146 = vpop.xlane.xlu0 %145
    %v147 = vrot.slane %v146, 4
    %v148 = vadd.f32 %v146, %v147
    %v149 = vrot.slane %v148, 2
    %v150 = vadd.f32 %v148, %v149
    %v151 = vrot.slane %v150, 1
    %v152 = vadd.f32 %v150, %v151
    %s153 = vtos %v152
    %s154 = smul.f32 %s153, 0.0005
    %s155 = sadd.f32 %s129, %s154
    %s156 = scalar_lea.smem [#allocation2], 0
    %157 = sst [smem:[%s156]] %s155
    // Predicated region
    $region38: #{tpu_custom_call.1} parent=1 // pred_check
      %p158 = pneg %p65
    $region39: #{tpu_custom_call.1} parent=1 // pred_check_branch
      %160 = sbr.rel (%p158) target = $region41
    $region40: #{tpu_custom_call.1} parent=1 // pred_region
      %s161 = sld [smem:[#allocation2]]
      %s162 = scalar_lea.smem [#allocation11], 0
      %163 = sst [smem:[%s162]] %s161
    $region41: #{tpu_custom_call.1} parent=1 // pred_fallthru
      _
    // Predicated region
    $region42: #{tpu_custom_call.1} parent=1 // pred_check
      _
    $region43: #{tpu_custom_call.1} parent=1 // pred_check_branch
      %165 = sbr.rel (0) target = $region45
    $region44: #{tpu_custom_call.1} parent=1 // pred_region
      %s167 = ssub.s32 16, 16
      %168 = vsyncadd [#allocation5], %s167
      %171 = dma.smem_to_hbm [#allocation11], 16, %s4, [#allocation5]
    $region45: #{tpu_custom_call.1} parent=1 // pred_fallthru
      _
    // Predicated region
    $region46: #{tpu_custom_call.1} parent=1 // pred_check
      _
    $region47: #{tpu_custom_call.1} parent=1 // pred_check_branch
      %173 = sbr.rel (0) target = $region49
    $region48: #{tpu_custom_call.1} parent=1 // pred_region
      %174 = dma.done [#allocation5], 16
    $region49: #{tpu_custom_call.1} parent=1 // pred_fallthru
      _
    %175 = sfence
    %176 = vsyncpa [#allocation4], 1
    %177 = vsyncpa [#allocation7], 1
    %178 = vsyncpa [#allocation10], 1
    %179 = vsyncpa [#allocation5], 1

</llo_original>
